<compile_context>
chip_gen: v5e
topology: v5e:2x2
jax: 0.10.0
libtpu: 0.0.40
codegen_flags: <defaults>
</compile_context>

<pallas_src>
import jax
import jax.numpy as jnp
from jax.experimental import pallas as pl
from jax.experimental.pallas import tpu as pltpu


def _round_up(x, m):
    return (x + m - 1) // m * m


def gcn_kernel(x_ref, adj_ref, w_ref, o_ref):
    """One grid step processes `bt` batch elements.

    x_ref   (bt*N, in_dim)   f32   batch-flattened node features
    adj_ref (bt, N, N)       f32   adjacency (dominant HBM read, cast here)
    w_ref   (in_dim, out_p)  bf16  GCN weight, out_dim zero-padded to 128 lanes
    o_ref   (bt, N, out_p)   f32
    """
    bt, n, _ = adj_ref.shape
    out_p = o_ref.shape[-1]

    # Phase 1: XW for all bt*N rows in one bf16 MXU matmul (f32 accumulate).
    x_b = x_ref[...].astype(jnp.bfloat16)
    xw = jnp.dot(x_b, w_ref[...], preferred_element_type=jnp.float32)
    xw_b = xw.reshape(bt, n, out_p).astype(jnp.bfloat16)

    # Phase 2: batched AXW = adj @ XW.  adj is cast f32->bf16 here, in VMEM,
    # so the HBM stream stays the native dtype (no wrapper convert pass).
    adj_b = adj_ref[...].astype(jnp.bfloat16)
    axw = jnp.einsum("bnm,bmo->bno", adj_b, xw_b,
                     preferred_element_type=jnp.float32)

    # Epilogue (f32): relu -> node-mean normalisation -> softplus.
    y = jnp.maximum(axw, 0.0)
    col_mean = jnp.mean(y, axis=1, keepdims=True) + 1e-6      # mean over nodes
    y_norm = y * pl.reciprocal(col_mean, approx=True)         # EUP reciprocal
    # softplus(t) for t >= 0:  t + log1p(exp(-t))  (no logaddexp guard ops).
    o_ref[...] = (y_norm + jnp.log1p(jnp.exp(-y_norm))).astype(o_ref.dtype)


def _step_vmem_bytes(bt, n, in_dim, out_p):
    """VMEM bytes for one grid step, modelling real (sublane, lane) padding of
    the pipelined blocks plus the in-kernel intermediates."""
    # Double-buffered pipelined blocks.
    x_blk = _round_up(bt * n, 8) * _round_up(in_dim, 128) * 4          # f32
    adj_blk = bt * _round_up(n, 8) * _round_up(n, 128) * 4             # f32
    out_blk = bt * _round_up(n, 8) * out_p * 4                         # f32
    w_blk = _round_up(in_dim, 16) * out_p * 2                          # bf16
    pipelined = 2 * (x_blk + adj_blk + out_blk + w_blk)
    # In-kernel intermediates: xw f32 + xw_b bf16 + adj_b bf16 + y/y_norm f32.
    inter = (bt * _round_up(n, 8) * out_p * (4 + 2 + 4 + 4)
             + bt * _round_up(n, 16) * _round_up(n, 128) * 2)
    return pipelined + inter


def _pick_batch_tile(batch, n, in_dim, out_p, budget_bytes, *, min_steps=4):
    """Largest batch tile that divides B, fits the VMEM budget, keeps the
    flattened x block sublane-aligned, and (when possible) leaves >= min_steps
    grid steps so every TensorCore still gets >= 2 pipelined steps."""
    fits = [d for d in range(1, batch + 1)
            if batch % d == 0
            and (d == batch or (d * n) % 8 == 0)
            and _step_vmem_bytes(d, n, in_dim, out_p) <= budget_bytes]
    if not fits:
        return 1
    for steps in (min_steps, 2):
        cand = [d for d in fits if batch // d >= steps]
        if cand:
            return max(cand)
    return max(fits)


def gcn_forward(x, adj, w, *, batch_tile=None):
    B, N, in_dim = x.shape
    out_dim = w.shape[1]
    assert adj.shape == (B, N, N)
    assert w.shape == (in_dim, out_dim)

    # Lane-dense output: pad the output-feature dim to a multiple of 128 so the
    # store is full-width; padding columns are sliced off below.
    out_p = _round_up(out_dim, 128)
    # W is tiny and grid-invariant: pad + cast to bf16 once in the wrapper.
    w_p = jnp.pad(w.astype(jnp.bfloat16), ((0, 0), (0, out_p - out_dim)))

    # Batch-flattened features so phase 1 is one (bt*N, in_dim) matmul.
    x2d = x.astype(jnp.float32).reshape(B * N, in_dim)
    # adj stays in its native f32: the bf16 cast happens inside the kernel so
    # no extra HBM convert pass is paid on the dominant stream.
    adj_f = adj.astype(jnp.float32)

    # Generation-aware VMEM limit / tile budget.
    try:
        vmem_cap = int(pltpu.get_tpu_info().vmem_capacity_bytes)
    except Exception:
        vmem_cap = 64 * 1024 * 1024          # conservative fallback (v7x-safe)
    vmem_limit = int(vmem_cap * 0.8)         # ~102 MiB on v5e/v6e, ~51 MiB v7x
    tile_budget = int(vmem_limit * 0.8)      # headroom for compiler scratch

    bt = batch_tile if batch_tile is not None else _pick_batch_tile(
        B, N, in_dim, out_p, tile_budget)
    assert B % bt == 0, "batch_tile must divide the batch size"
    # x2d blocks of bt*N rows must stay sublane-aligned unless they span all rows.
    assert bt == B or (bt * N) % 8 == 0

    out_padded = pl.pallas_call(
        gcn_kernel,
        out_shape=jax.ShapeDtypeStruct((B, N, out_p), jnp.float32),
        grid_spec=pltpu.PrefetchScalarGridSpec(
            num_scalar_prefetch=0,
            grid=(B // bt,),
            in_specs=[
                pl.BlockSpec((bt * N, in_dim), lambda b: (b, 0)),   # x (flattened)
                pl.BlockSpec((bt, N, N), lambda b: (b, 0, 0)),      # adj (f32)
                # W: constant index map -> fetched once, revisited every step.
                pl.BlockSpec((in_dim, out_p), lambda b: (0, 0)),
            ],
            out_specs=pl.BlockSpec((bt, N, out_p), lambda b: (b, 0, 0)),
        ),
        compiler_params=pltpu.CompilerParams(
            dimension_semantics=("parallel",),   # batch tiles -> both v7x TCs
            vmem_limit_bytes=vmem_limit,
        ),
    )(x2d, adj_f, w_p)

    # TODO(synk): when out_dim << 128 and downstream consumers can take the
    # padded layout, skip this slice (it is an extra HBM pass over the output).
    return out_padded[..., :out_dim]


def gcn_reference(x, adj, w, *, matmul_dtype=jnp.float32):
    """Pure-JAX reference of the module's forward.  matmul_dtype=bfloat16
    mirrors the kernel's reduced-precision matmul operands (f32 accumulation
    and f32 epilogue).  Returns (output, col_mean)."""
    xd = x.astype(matmul_dtype)
    wd = w.astype(matmul_dtype)
    xw = jnp.einsum("bni,io->bno", xd, wd,
                    preferred_element_type=jnp.float32).astype(matmul_dtype)
    axw = jnp.einsum("bnm,bmo->bno", adj.astype(matmul_dtype), xw,
                     preferred_element_type=jnp.float32)
    y = jax.nn.relu(axw)
    col_mean = jnp.mean(y, axis=-2, keepdims=True) + 1e-6
    return jax.nn.softplus(y / col_mean), col_mean


if __name__ == "__main__":
    key = jax.random.PRNGKey(0)
    k_x, k_adj, k_w = jax.random.split(key, 3)

    B, N = 2, 16
    in_dim, out_dim = 8, 32

    x = jax.random.normal(k_x, (B, N, in_dim), dtype=jnp.float32)

    # Symmetric non-negative adjacency (graph-like), deterministic.
    a = jax.random.uniform(k_adj, (B, N, N), dtype=jnp.float32)
    adj = 0.5 * (a + jnp.swapaxes(a, -1, -2))

    # Xavier-normal init of the GCN kernel parameter (deterministic).
    std = (2.0 / (in_dim + out_dim)) ** 0.5
    w = std * jax.random.normal(k_w, (in_dim, out_dim), dtype=jnp.float32)

    out = jax.jit(gcn_forward)(x, adj, w)
    out = jax.block_until_ready(out)
    assert out.shape == (B, N, out_dim)

    # 1) Tight check vs. a reference at the kernel's working precision
    #    (bf16 matmul operands, f32 accumulate + epilogue).  Residual deltas
    #    are only the approximate reciprocal and MXU accumulation order.
    ref_b, _ = gcn_reference(x, adj, w, matmul_dtype=jnp.bfloat16)
    assert jnp.allclose(out, ref_b, atol=2e-2, rtol=2e-2), \
        "mismatch vs bf16-matched reference"

    # 2) Looser check vs. the exact f32 module semantics, restricted to
    #    well-conditioned output columns.  Columns whose node-mean activation
    #    is ~0 get normalised by ~1e-6 in the module itself, so a bf16-sized
    #    perturbation of AXW legitimately flips them between softplus(0) and
    #    softplus(~N); comparing those across precisions is meaningless.
    ref_f, col_mean_f = gcn_reference(x, adj, w)
    well_conditioned = col_mean_f > 0.1
    close = jnp.abs(out - ref_f) <= 0.1 + 0.1 * jnp.abs(ref_f)
    assert bool(jnp.all(jnp.where(well_conditioned, close, True))), \
        "mismatch vs f32 reference"

    print("KERNEL_OK")
</pallas_src>

<mosaic_0001>
module attributes {stable_mosaic.version = 11 : i64} {
  func.func @gcn_kernel(%arg0: i32, %arg1: memref<16x8xf32, #tpu.memory_space<vmem>>, %arg2: memref<1x16x16xf32, #tpu.memory_space<vmem>>, %arg3: memref<8x128xbf16, #tpu.memory_space<vmem>>, %arg4: memref<1x16x128xf32, #tpu.memory_space<vmem>>) attributes {dimension_semantics = [#tpu.dimension_semantics<parallel>], iteration_bounds = array<i64: 2>, scalar_prefetch = 0 : i64, scratch_operands = 0 : i64, tpu.core_type = #tpu.core_type<tc>, window_params = [{transform_indices = @transform_0, window_bounds = array<i64: 16, 8>}, {transform_indices = @transform_1, window_bounds = array<i64: 1, 16, 16>}, {pipeline_mode = #tpu.pipeline_mode<synchronous>, transform_indices = @transform_2, window_bounds = array<i64: 8, 128>}, {transform_indices = @transform_3, window_bounds = array<i64: 1, 16, 128>}]} {
    %c0 = arith.constant 0 : index
    %c0_0 = arith.constant 0 : index
    %0 = vector.load %arg1[%c0, %c0_0] : memref<16x8xf32, #tpu.memory_space<vmem>>, vector<16x8xf32>
    %1 = arith.truncf %0 : vector<16x8xf32> to vector<16x8xbf16>
    %c0_1 = arith.constant 0 : index
    %c0_2 = arith.constant 0 : index
    %2 = vector.load %arg3[%c0_1, %c0_2] : memref<8x128xbf16, #tpu.memory_space<vmem>>, vector<8x128xbf16>
    %cst = arith.constant dense<0.000000e+00> : vector<16x128xf32>
    %3 = tpu.matmul %1, %2, %cst {dimension_numbers = #tpu.dot_dimension_numbers<[1], [0], [0], [1], [0, 0, 1, 1], [], []>} : vector<16x8xbf16>, vector<8x128xbf16>, vector<16x128xf32> -> vector<16x128xf32>
    %4 = vector.shape_cast %3 : vector<16x128xf32> to vector<1x16x128xf32>
    %5 = arith.truncf %4 : vector<1x16x128xf32> to vector<1x16x128xbf16>
    %c0_3 = arith.constant 0 : index
    %c0_4 = arith.constant 0 : index
    %c0_5 = arith.constant 0 : index
    %6 = vector.load %arg2[%c0_3, %c0_4, %c0_5] : memref<1x16x16xf32, #tpu.memory_space<vmem>>, vector<1x16x16xf32>
    %7 = arith.truncf %6 : vector<1x16x16xf32> to vector<1x16x16xbf16>
    "tpu.trace_start"() <{level = 10 : i32, message = "bnm,bmo->bno"}> : () -> ()
    %cst_6 = arith.constant dense<0.000000e+00> : vector<1x16x128xf32>
    %8 = tpu.matmul %7, %5, %cst_6 {dimension_numbers = #tpu.dot_dimension_numbers<[2], [1], [1], [2], [0, 0, 0, 1, 1, 2], [0], [0]>} : vector<1x16x16xbf16>, vector<1x16x128xbf16>, vector<1x16x128xf32> -> vector<1x16x128xf32>
    "tpu.trace_stop"() : () -> ()
    %cst_7 = arith.constant 0.000000e+00 : f32
    %9 = vector.broadcast %cst_7 : f32 to vector<1x16x128xf32>
    %10 = arith.maximumf %8, %9 : vector<1x16x128xf32>
    %cst_8 = arith.constant dense<0.000000e+00> : vector<1x128xf32>
    %11 = vector.multi_reduction <add>, %10, %cst_8 [1] : vector<1x16x128xf32> to vector<1x128xf32>
    %12 = vector.shape_cast %11 : vector<1x128xf32> to vector<1x1x128xf32>
    %cst_9 = arith.constant 1.600000e+01 : f32
    %13 = vector.broadcast %cst_9 : f32 to vector<1x1x128xf32>
    %14 = arith.divf %12, %13 : vector<1x1x128xf32>
    %cst_10 = arith.constant 9.99999997E-7 : f32
    %15 = vector.broadcast %cst_10 : f32 to vector<1x1x128xf32>
    %16 = arith.addf %14, %15 : vector<1x1x128xf32>
    %17 = tpu.reciprocal %16 {approx = true} : vector<1x1x128xf32> -> vector<1x1x128xf32>
    %18 = vector.broadcast %17 : vector<1x1x128xf32> to vector<1x16x128xf32>
    %19 = arith.mulf %10, %18 : vector<1x16x128xf32>
    %cst_11 = arith.constant 0.000000e+00 : f32
    %20 = vector.broadcast %cst_11 : f32 to vector<1x16x128xf32>
    %21 = arith.subf %20, %19 : vector<1x16x128xf32>
    %22 = math.exp %21 : vector<1x16x128xf32>
    %23 = math.log1p %22 : vector<1x16x128xf32>
    %24 = arith.addf %19, %23 : vector<1x16x128xf32>
    %c0_12 = arith.constant 0 : index
    %c0_13 = arith.constant 0 : index
    %c0_14 = arith.constant 0 : index
    %25 = vector.load %arg4[%c0_12, %c0_13, %c0_14] : memref<1x16x128xf32, #tpu.memory_space<vmem>>, vector<1x16x128xf32>
    tpu.vector_store %arg4[%c0_12, %c0_13, %c0_14], %24 {strides = array<i32>} : memref<1x16x128xf32, #tpu.memory_space<vmem>>, vector<1x16x128xf32>,
    return
  }
  func.func @transform_0(%arg0: i32) -> (i32, i32) {
    %c0_i32 = arith.constant 0 : i32
    %c0_i32_0 = arith.constant 0 : i32
    return %arg0, %c0_i32 : i32, i32
  }
  func.func @transform_1(%arg0: i32) -> (i32, i32, i32) {
    %c0_i32 = arith.constant 0 : i32
    %c0_i32_0 = arith.constant 0 : i32
    %c0_i32_1 = arith.constant 0 : i32
    return %arg0, %c0_i32, %c0_i32_0 : i32, i32, i32
  }
  func.func @transform_2(%arg0: i32) -> (i32, i32) {
    %c0_i32 = arith.constant 0 : i32
    %c0_i32_0 = arith.constant 0 : i32
    %c0_i32_1 = arith.constant 0 : i32
    return %c0_i32, %c0_i32_0 : i32, i32
  }
  func.func @transform_3(%arg0: i32) -> (i32, i32, i32) {
    %c0_i32 = arith.constant 0 : i32
    %c0_i32_0 = arith.constant 0 : i32
    %c0_i32_1 = arith.constant 0 : i32
    return %arg0, %c0_i32, %c0_i32_0 : i32, i32, i32
  }
}

</mosaic_0001>

<llo_original>
// kernel: gcn_forward.1
$region0: #{gcn_forward.1}
  #allocation0 [shape = 'u32[]', space=smem, size = 0x4, offset = 0x4, fixed_abs, tag = 'smem constant byte address 0x4 - core index']
  #allocation1 [shape = 'u32[72,128]{1,0:T(1,128)}', space=vmem, size = 0x9000, scoped, tag = 'internal scratch']
  %s0 = inlined_call_operand.vmem [shape: f32[32,8], index: 0, kind: input, shape index: {}]
  %s1 = inlined_call_operand.vmem [shape: f32[2,16,16], index: 1, kind: input, shape index: {}]
  %s2 = inlined_call_operand.vmem [shape: bf16[8,128], index: 2, kind: input, shape index: {}]
  %s3 = inlined_call_operand.hbm [shape: f32[2,16,128], index: 3, kind: output, shape index: {}]
  %s4 = sld [smem:[#allocation0]]
  $region45: #{gcn_forward.1} parent=0
    _
  %s6 = ssub.s32 1, %s4
  %s7 = scalar_select 0, %s6, %s4
  $region1: #{gcn_forward.1} parent=0
    #allocation2 [shape = 'u8[16384]{0}', space=vmem, size = 0x4000, scoped, tag = 'output window, operand 0']
    #allocation3 [shape = 's32[2]{0}', space=sflag, size = 0x8, scoped, tag = 'scoped memory for gcn_forward.1']
    %8 = vsyncpa [#allocation3], 0
    %s9 = scalar_lea.sflag [#allocation3], 1
    %10 = vsyncpa %s9, 0
    loop: start=0, step=1, limit=4
    $region2: #{gcn_forward.1} parent=1 // loop_pre_header
      _
    $region3: #{gcn_forward.1} parent=1 // loop_header
      %s12 = sphi 0, %s16
      %p13 = scmp.ge.s32.totalorder %s12, 4
      %s22 = sphi 0, %s24
      %s25 = sphi 0, %s22
      %s26 = sphi 0, %s25
      %s42 = sphi 0, %s26
      %s48 = sphi 0, %s50
      %s51 = sphi 0, %s48
      %s52 = sphi 0, %s51
      %s68 = sphi 0, %s52
      %s72 = sphi 0, %s72
      %s74 = sphi 0, %s72
      %s75 = sphi 0, %s74
      %s89 = sphi 0, %s75
      %s95 = sphi 0, %s97
      %s98 = sphi 0, %s95
      %s99 = sphi 0, %s98
      %s115 = sphi 0, %s99
    $region4: #{gcn_forward.1} parent=1 // loop_header_branch
      %15 = sbr.rel (%p13) target = $region8
    $region5: #{gcn_forward.1} parent=1 // loop_body
      %s17 = ssub.s32 %s12, 1
      %s18 = ssub.s32 %s12, 2
      %s19 = sadd.s32 %s12, 1
      %s20 = ssub.s32 %s12, %s19
      %p21 = scmp.eq.s32.totalorder %s20, 0
      %s23 = sadd.s32 %s22, 1
      %s24 = scalar_select %p21, %s22, %s23
      %p27 = pneg %p21
      %p28 = scmp.eq.s32.totalorder %s12, 1
      %p29 = por %p27, %p28
      %p30 = scmp.ne.s32.totalorder %s22, %s25
      %p31 = scmp.eq.s32.totalorder %s12, 0
      %p32 = por %p30, %p31
      %p33 = scmp.ne.s32.totalorder %s22, %s25
      %p34 = scmp.eq.s32.totalorder %s17, 1
      %p35 = por %p33, %p34
      %p36 = scmp.ne.s32.totalorder %s25, %s26
      %p37 = scmp.eq.s32.totalorder %s17, 0
      %p38 = por %p36, %p37
      %p39 = scmp.ne.s32.totalorder %s25, %s26
      %p40 = scmp.eq.s32.totalorder %s18, 1
      %p41 = por %p39, %p40
      %p43 = scmp.ne.s32.totalorder %s26, %s42
      %p44 = scmp.eq.s32.totalorder %s18, 0
      %p45 = por %p43, %p44
      %s46 = ssub.s32 %s12, %s19
      %p47 = scmp.eq.s32.totalorder %s46, 0
      %s49 = sadd.s32 %s48, 1
      %s50 = scalar_select %p47, %s48, %s49
      %p53 = pneg %p47
      %p54 = scmp.eq.s32.totalorder %s12, 1
      %p55 = por %p53, %p54
      %p56 = scmp.ne.s32.totalorder %s48, %s51
      %p57 = scmp.eq.s32.totalorder %s12, 0
      %p58 = por %p56, %p57
      %p59 = scmp.ne.s32.totalorder %s48, %s51
      %p60 = scmp.eq.s32.totalorder %s17, 1
      %p61 = por %p59, %p60
      %p62 = scmp.ne.s32.totalorder %s51, %s52
      %p63 = scmp.eq.s32.totalorder %s17, 0
      %p64 = por %p62, %p63
      %p65 = scmp.ne.s32.totalorder %s51, %s52
      %p66 = scmp.eq.s32.totalorder %s18, 1
      %p67 = por %p65, %p66
      %p69 = scmp.ne.s32.totalorder %s52, %s68
      %p70 = scmp.eq.s32.totalorder %s18, 0
      %p71 = por %p69, %p70
      %s73 = sadd.s32 %s72, 1
      %p76 = scmp.eq.s32.totalorder %s12, 1
      %p77 = scmp.ne.s32.totalorder %s72, %s74
      %p78 = scmp.eq.s32.totalorder %s12, 0
      %p79 = por %p77, %p78
      %p80 = scmp.ne.s32.totalorder %s72, %s74
      %p81 = scmp.eq.s32.totalorder %s17, 1
      %p82 = por %p80, %p81
      %p83 = scmp.ne.s32.totalorder %s74, %s75
      %p84 = scmp.eq.s32.totalorder %s17, 0
      %p85 = por %p83, %p84
      %p86 = scmp.ne.s32.totalorder %s74, %s75
      %p87 = scmp.eq.s32.totalorder %s18, 1
      %p88 = por %p86, %p87
      %p90 = scmp.ne.s32.totalorder %s75, %s89
      %p91 = scmp.eq.s32.totalorder %s18, 0
      %p92 = por %p90, %p91
      %s93 = ssub.s32 %s12, %s19
      %p94 = scmp.eq.s32.totalorder %s93, 0
      %s96 = sadd.s32 %s95, 1
      %s97 = scalar_select %p94, %s95, %s96
      %p100 = pneg %p94
      %p101 = scmp.eq.s32.totalorder %s12, 1
      %p102 = por %p100, %p101
      %p103 = scmp.ne.s32.totalorder %s95, %s98
      %p104 = scmp.eq.s32.totalorder %s12, 0
      %p105 = por %p103, %p104
      %p106 = scmp.ne.s32.totalorder %s95, %s98
      %p107 = scmp.eq.s32.totalorder %s17, 1
      %p108 = por %p106, %p107
      %p109 = scmp.ne.s32.totalorder %s98, %s99
      %p110 = scmp.eq.s32.totalorder %s17, 0
      %p111 = por %p109, %p110
      %p112 = scmp.ne.s32.totalorder %s98, %s99
      %p113 = scmp.eq.s32.totalorder %s18, 1
      %p114 = por %p112, %p113
      %p116 = scmp.ne.s32.totalorder %s99, %s115
      %p117 = scmp.eq.s32.totalorder %s18, 0
      %p118 = por %p116, %p117
      %p119 = scmp.le.s32.totalorder 1, %s12
      %p120 = scmp.lt.s32.totalorder %s12, 3
      %p121 = pnand %p119, %p120
      %p122 = pneg %p121
      // Predicated region
      $region9: #{gcn_forward.1} parent=5 // pred_check
        _
      $region10: #{gcn_forward.1} parent=5 // pred_check_branch
        %124 = sbr.rel (%p121) target = $region12
      $region11: #{gcn_forward.1} parent=5 // pred_region
        %s125 = ssub.s32 %s12, 1
        // Predicated region
        $region13: #{gcn_forward.1} parent=11 // pred_check
          %p126 = pneg %p85
        $region14: #{gcn_forward.1} parent=11 // pred_check_branch
          %128 = sbr.rel (%p126) target = $region16
        $region15: #{gcn_forward.1} parent=11 // pred_region
          _
        $region16: #{gcn_forward.1} parent=11 // pred_fallthru
          _
      $region12: #{gcn_forward.1} parent=5 // pred_fallthru
        _
      %p129 = scmp.lt.s32.totalorder %s12, 2
      // Predicated region
      $region17: #{gcn_forward.1} parent=5 // pred_check
        %p130 = pneg %p129
      $region18: #{gcn_forward.1} parent=5 // pred_check_branch
        %132 = sbr.rel (%p130) target = $region20
      $region19: #{gcn_forward.1} parent=5 // pred_region
        // Predicated region
        $region21: #{gcn_forward.1} parent=19 // pred_check
          %p133 = pneg %p32
        $region22: #{gcn_forward.1} parent=19 // pred_check_branch
          %135 = sbr.rel (%p133) target = $region24
        $region23: #{gcn_forward.1} parent=19 // pred_region
          %s136 = smul.u32 2, %s12
          %p137 = scmp.lt.s32.totalorder %s136, 3
          %s138 = scalar_select %p137, %s136, 3
          %s139 = smul.addr %s138, 8
          %s140 = scalar_lea.vmem %s0, %s139
          %s141 = smul.u32 2, %s12
        $region24: #{gcn_forward.1} parent=19 // pred_fallthru
          _
        // Predicated region
        $region25: #{gcn_forward.1} parent=19 // pred_check
          %p142 = pneg %p58
        $region26: #{gcn_forward.1} parent=19 // pred_check_branch
          %144 = sbr.rel (%p142) target = $region28
        $region27: #{gcn_forward.1} parent=19 // pred_region
          %p145 = scmp.lt.s32.totalorder %s12, 1
          %s146 = scalar_select %p145, %s12, 1
          %s147 = smul.addr %s146, 2
          %s148 = smul.addr %s147, 8
          %s149 = scalar_lea.vmem %s1, %s148
        $region28: #{gcn_forward.1} parent=19 // pred_fallthru
          _
      $region20: #{gcn_forward.1} parent=5 // pred_fallthru
        _
      %p150 = scmp.le.s32.totalorder 1, %s12
      %p151 = scmp.lt.s32.totalorder %s12, 3
      %p152 = pnand %p150, %p151
      %p153 = pneg %p152
      // Predicated region
      $region29: #{gcn_forward.1} parent=5 // pred_check
        _
      $region30: #{gcn_forward.1} parent=5 // pred_check_branch
        %155 = sbr.rel (%p152) target = $region32
      $region31: #{gcn_forward.1} parent=5 // pred_region
        %s156 = ssub.s32 %s12, 1
        %s157 = smul.u32 2, %s17
        %p158 = scmp.lt.s32.totalorder %s157, 3
        %s159 = scalar_select %p158, %s157, 3
        %s160 = smul.addr %s159, 8
        %s161 = scalar_lea.vmem %s0, %s160
        %p162 = pneg %p38
        %p163 = pneg %p35
        %p164 = scmp.lt.s32.totalorder %s17, 1
        %s165 = scalar_select %p164, %s17, 1
        %s166 = smul.addr %s165, 2
        %s167 = smul.addr %s166, 8
        %s168 = scalar_lea.vmem %s1, %s167
        %p169 = pneg %p64
        %p170 = pneg %p61
        %p171 = pneg %p85
        %p172 = pneg %p82
        %p173 = pneg %p111
        %p174 = pneg %p108
        %s175 = sand.u32 %s98, 1
        %s176 = scalar_lea.sflag [#allocation3], %s175
        %s177 = sand.u32 %s98, 1
        %s178 = smul.addr %s177, 16
        %s179 = scalar_lea.vmem [#allocation2], %s178
        %s180 = smul.u32 2, %s17
        %p181 = scmp.lt.s32.totalorder %s180, 3
        %s182 = scalar_select %p181, %s180, 3
        %s183 = smul.addr %s182, 8
        %s184 = scalar_lea.vmem %s0, %s183
        %s185 = smul.u32 2, %s17
        %p186 = scmp.lt.s32.totalorder %s17, 1
        %s187 = scalar_select %p186, %s17, 1
        %s188 = smul.addr %s187, 2
        %s189 = smul.addr %s188, 8
        %s190 = scalar_lea.vmem %s1, %s189
        %v192 = vld [vmem:[%s184] sm:$0xff]
        %v193 = vld [vmem:[%s184 + $0x8] sm:$0xff]
        %v194 = vpack.c.bf16 %v193, %v192
        %v195 = vld [vmem:[%s2] sm:$0xf]
        %vm196 = vcmask 64512
        %v198 = vsel %vm196, %v194, 0
        %vm200 = vcmask 1043456
        %v202 = vsel %vm200, %v195, 0
        %204 = vmatpush.bf16.msra.mxu0 0
        %205 = vmatpush.bf16.msra.mxu0 0
        %206 = vmatpush.bf16.msra.mxu0 0
        %207 = vmatpush.bf16.msra.mxu0 0
        %208 = vmatpush.bf16.msra.mxu0 0
        %209 = vmatpush.bf16.msra.mxu0 0
        %210 = vmatpush.bf16.msra.mxu0 0
        %211 = vmatpush.bf16.msra.mxu0 %v202
        %212 = vmatmul.bf16.gmra.mxu0 %v198
        %v213 = vpop.f32.mrf.mxu0
        %v214 = vadd.f32 0.0, %v213
        %v215 = vpop.f32.mrf.mxu0
        %v216 = vadd.f32 0.0, %v215
        %217 = vdwg.mxu0
        %v218 = vpack.c.bf16 %v214, %v214
        %v219 = vpack.c.bf16 %v216, %v216
        %v220 = vld [vmem:[%s190] sm:$0xff]
        %v221 = vld [vmem:[%s190 + $0x8] sm:$0xff]
        %v222 = vpack.c.bf16 %v220, %v220
        %v223 = vpack.c.bf16 %v221, %v221
        %v226 = vunpack.c.l.b16 %v222
        %v227 = vunpack.c.l.b16 %v223
        %v228 = vpack.c.b16 %v227, %v226
        %v231 = vunpack.c.l.b16 %v218
        %v232 = vunpack.c.l.b16 %v219
        %v233 = vpack.c.b16 %v232, %v231
        %vm235 = vcmask 130048
        %v237 = vsel %vm235, %v228, 0
        %239 = vmatpush.bf16.msra.mxu0 0
        %240 = vmatpush.bf16.msra.mxu0 0
        %241 = vmatpush.bf16.msra.mxu0 0
        %242 = vmatpush.bf16.msra.mxu0 0
        %243 = vmatpush.bf16.msra.mxu0 0
        %244 = vmatpush.bf16.msra.mxu0 0
        %245 = vmatpush.bf16.msra.mxu0 0
        %246 = vmatpush.bf16.msra.mxu0 %v233
        %247 = vmatmul.bf16.gmra.mxu0 %v237
        %v248 = vpop.f32.mrf.mxu0
        %v249 = vadd.f32 0.0, %v248
        %v250 = vpop.f32.mrf.mxu0
        %v251 = vadd.f32 0.0, %v250
        %252 = vdwg.mxu0
        %v253 = vmax.f32 %v249, 0.0
        %v254 = vmax.f32 %v251, 0.0
        %v255 = vadd.f32 %v253, %v254
        %v256 = vrot.slane %v255, 4
        %v257 = vadd.f32 %v255, %v256
        %v258 = vrot.slane %v257, 2
        %v259 = vadd.f32 %v257, %v258
        %v260 = vrot.slane %v259, 1
        %v261 = vadd.f32 %v259, %v260
        %v262 = vrcp.pop 16.0
        %v263 = vmul.f32 16.0, %v262
        %v264 = vsub.f32 1.0, %v263
        %v265 = vmul.f32 %v262, %v264
        %v266 = vadd.f32 %v262, %v265
        %vm267 = vweird.f32 %v262
        %v268 = vsel %vm267, %v262, %v266
        %v269 = vmul.f32 %v261, %v268
        %v270 = vadd.f32 %v269, 1e-06
        %v271 = vrcp.pop %v270
        %v272 = vmul.f32 %v253, %v271
        %v273 = vmul.f32 %v254, %v271
        %v274 = vsub.f32 0.0, %v272
        %v275 = vsub.f32 0.0, %v273
        %v276 = vmul.f32 %v274, 1.442695
        %v277 = vpow.pop %v276
        %v278 = vmul.f32 %v275, 1.442695
        %v279 = vpow.pop %v278
        %v280 = vadd.f32 %v277, 1.0
        %v281 = vlog2.pop %v280
        %v282 = vmul.f32 %v281, 0.6931472
        %v283 = vmul.f32 -0.5, %v277
        %v284 = vadd.f32 %v283, 1.0
        %v285 = vmul.f32 %v284, %v277
        %v286 = vand.u32 2147483647, %v277
        %vm287 = vcmp.lt.f32.partialorder %v286, 0.0004427343
        %v288 = vsel %vm287, %v285, %v282
        %v289 = vadd.f32 %v279, 1.0
        %v290 = vlog2.pop %v289
        %v291 = vmul.f32 %v290, 0.6931472
        %v292 = vmul.f32 -0.5, %v279
        %v293 = vadd.f32 %v292, 1.0
        %v294 = vmul.f32 %v293, %v279
        %v295 = vand.u32 2147483647, %v279
        %vm296 = vcmp.lt.f32.partialorder %v295, 0.0004427343
        %v297 = vsel %vm296, %v294, %v291
        %v298 = vadd.f32 %v272, %v288
        %v299 = vadd.f32 %v273, %v297
        %300 = vst [vmem:[%s179] sm:$0xff] %v298
        %301 = vst [vmem:[%s179 + $0x8] sm:$0xff] %v299
        %s302 = sand.u32 %s98, 1
        %s303 = scalar_lea.sflag [#allocation3], %s302
        %s304 = sand.u32 %s98, 1
        %s305 = smul.addr %s304, 16
        %s306 = scalar_lea.vmem [#allocation2], %s305
        // Predicated region
        $region33: #{gcn_forward.1} parent=31 // pred_check
          %p307 = pneg %p108
        $region34: #{gcn_forward.1} parent=31 // pred_check_branch
          %309 = sbr.rel (%p307) target = $region36
        $region35: #{gcn_forward.1} parent=31 // pred_region
          %311 = vsyncadd %s303, 0
          %s312 = smul.addr %s17, 2
          %s313 = smul.addr %s312, 8
          %s314 = scalar_lea.hbm %s3, %s313
          %s315 = sshll.u32 %s306, 4
          %s316 = int_to_ptr.vmem [resolvable:$true] %s315
          %s317 = sshll.u32 %s314, 4
          %s318 = int_to_ptr.hbm [resolvable:$true] %s317
          %323 = dma.vmem_to_hbm [thread:$0]  %s316, 256, %s318, %s303, 128, 128, 8
        $region36: #{gcn_forward.1} parent=31 // pred_fallthru
          _
      $region32: #{gcn_forward.1} parent=5 // pred_fallthru
        _
      %p324 = scmp.le.s32.totalorder 2, %s12
      // Predicated region
      $region37: #{gcn_forward.1} parent=5 // pred_check
        %p325 = pneg %p324
      $region38: #{gcn_forward.1} parent=5 // pred_check_branch
        %327 = sbr.rel (%p325) target = $region40
      $region39: #{gcn_forward.1} parent=5 // pred_region
        %s328 = ssub.s32 %s12, 2
        // Predicated region
        $region41: #{gcn_forward.1} parent=39 // pred_check
          %p329 = pneg %p114
        $region42: #{gcn_forward.1} parent=39 // pred_check_branch
          %331 = sbr.rel (%p329) target = $region44
        $region43: #{gcn_forward.1} parent=39 // pred_region
          %s332 = sand.u32 %s99, 1
          %s333 = scalar_lea.sflag [#allocation3], %s332
          %s334 = sand.u32 %s99, 1
          %s335 = smul.addr %s334, 16
          %s336 = scalar_lea.vmem [#allocation2], %s335
          %338 = dma.done %s333, 256
        $region44: #{gcn_forward.1} parent=39 // pred_fallthru
          _
      $region40: #{gcn_forward.1} parent=5 // pred_fallthru
        _
    $region6: #{gcn_forward.1} parent=1 // loop_footer
      %s16 = sadd.s32 1, %s12
    $region7: #{gcn_forward.1} parent=1 // loop_footer_branch
      %11 = sbr.rel target = $region3
    $region8: #{gcn_forward.1} parent=1 // loop_exit
      _
    %339 = vsyncpa [#allocation3], 1
    %s340 = scalar_lea.sflag [#allocation3], 1
    %341 = vsyncpa %s340, 1

</llo_original>
